<compile_context>
chip_gen: v7x
topology: tpu7x:2x2x1
jax: 0.10.0
libtpu: 0.0.40
codegen_flags: <defaults>
</compile_context>

<pallas_src>
import jax
import jax.numpy as jnp
from jax.experimental import pallas as pl
from jax.experimental.pallas import tpu as pltpu

LANE = 128
ACC_ROWS = 32          # accumulator sublane rows -> 4 independent vreg add chains
SUBLANE_ALIGN = 32     # covers int8 (32,128) min tile; multiple of ACC_ROWS


def _make_weighted_kernel(num_classes, block_rows):
    """Weighted squared-error partial-sum kernel.

    Grid: (split, step).  axis 1 is the reduction axis (same output block is
    revisited), axis 0 selects the per-core partial-sum output block.
    """

    def kernel(w_ref, x_ref, y_ref, out_ref):
        i = pl.program_id(1)

        @pl.when(i == 0)
        def _():
            out_ref[...] = jnp.zeros_like(out_ref)

        x = x_ref[...].astype(jnp.float32)           # per-tile upcast
        y_raw = y_ref[...]                            # native dtype (int or float)
        yf = y_raw.astype(jnp.float32)
        yi = y_raw.astype(jnp.int32)                  # like torch .long()

        diff = x - yf

        # gather: w = weights[y]  (class-unrolled select; num_classes static/small).
        # Initialized with weights[0]; out-of-range labels fall through to it.
        w = jnp.full(x.shape, w_ref[0], dtype=jnp.float32)
        for c in range(1, num_classes):
            w = jnp.where(yi == c, w_ref[c], w)

        contrib = w * diff * diff                     # (block_rows, 128) f32
        out_ref[...] += jnp.sum(
            contrib.reshape(block_rows // ACC_ROWS, ACC_ROWS, LANE), axis=0)

    return kernel


def _make_plain_kernel(block_rows):
    """Unweighted squared-error partial-sum kernel."""

    def kernel(x_ref, y_ref, out_ref):
        i = pl.program_id(1)

        @pl.when(i == 0)
        def _():
            out_ref[...] = jnp.zeros_like(out_ref)

        diff = x_ref[...].astype(jnp.float32) - y_ref[...].astype(jnp.float32)
        sq = diff * diff
        out_ref[...] += jnp.sum(
            sq.reshape(block_rows // ACC_ROWS, ACC_ROWS, LANE), axis=0)

    return kernel


def weighted_categorical_mse(x, y, weights=None, *, block_rows=8192):
    """Pallas implementation of WeightedCategoricalMSE.forward."""
    n = x.size
    xf = x.reshape(-1)          # free reshape, native dtype (no astype copy)
    yf = y.reshape(-1)          # labels stay in their narrow native dtype

    rows_total = n // LANE

    # Biggest tile that fits, aligned to SUBLANE_ALIGN sublanes (sub-32-bit
    # dtype min-tile + exact (ACC_ROWS,128) accumulator reshape).
    br = min(block_rows, rows_total)
    br = (br // SUBLANE_ALIGN) * SUBLANE_ALIGN

    if br > 0:
        num_steps = rows_total // br
        n_splits = 2 if num_steps >= 2 else 1     # both TCs on v7x; no-op on 1-TC chips
        steps_per_core = num_steps // n_splits
        kernel_rows = n_splits * steps_per_core * br
    else:
        n_splits = 0
        steps_per_core = 0
        kernel_rows = 0

    tail_start = kernel_rows * LANE
    tail = n - tail_start

    # Tail (everything not covered by full blocks, at most ~2 blocks worth):
    # tiny pure-JAX reduction.  Keeps the hot kernel loop mask-free and avoids
    # padding the whole flattened array.
    if tail:
        xt = xf[tail_start:].astype(jnp.float32)
        yt = yf[tail_start:]
        dt = xt - yt.astype(jnp.float32)
        if weights is not None:
            wt = weights.reshape(-1).astype(jnp.float32)[yt.astype(jnp.int32)]
            tail_sum = jnp.sum(wt * dt * dt)
        else:
            tail_sum = jnp.sum(dt * dt)
    else:
        tail_sum = jnp.float32(0.0)

    if kernel_rows == 0:
        return tail_sum / jnp.float32(n)

    x2 = xf[:tail_start].reshape(kernel_rows, LANE)
    y2 = yf[:tail_start].reshape(kernel_rows, LANE)

    grid = (n_splits, steps_per_core)
    data_spec = pl.BlockSpec((br, LANE), lambda c, i: (c * steps_per_core + i, 0))
    # Lane-dense, per-core resident accumulator output block.
    out_spec = pl.BlockSpec((ACC_ROWS, LANE), lambda c, i: (c, 0))
    out_shape = jax.ShapeDtypeStruct((n_splits * ACC_ROWS, LANE), jnp.float32)
    cparams = pltpu.CompilerParams(
        dimension_semantics=("parallel", "arbitrary"),
        vmem_limit_bytes=32 * 1024 * 1024,
    )

    if weights is not None:
        w = weights.reshape(-1).astype(jnp.float32)
        kernel = _make_weighted_kernel(int(w.shape[0]), br)
        partials = pl.pallas_call(
            kernel,
            out_shape=out_shape,
            grid=grid,
            in_specs=[
                pl.BlockSpec(memory_space=pltpu.MemorySpace.SMEM),  # weights
                data_spec,                                          # x
                data_spec,                                          # y
            ],
            out_specs=out_spec,
            compiler_params=cparams,
        )(w, x2, y2)
    else:
        kernel = _make_plain_kernel(br)
        partials = pl.pallas_call(
            kernel,
            out_shape=out_shape,
            grid=grid,
            in_specs=[data_spec, data_spec],
            out_specs=out_spec,
            compiler_params=cparams,
        )(x2, y2)

    main_sum = jnp.sum(partials)      # tiny (n_splits*32, 128) XLA reduce
    return (main_sum + tail_sum) / jnp.float32(n)


if __name__ == "__main__":
    key = jax.random.PRNGKey(0)
    k1, k2, k3, k4 = jax.random.split(key, 4)

    C = 8
    weights = (jnp.arange(C, dtype=jnp.float32) + 1.0) / C

    # Case 1: x is a prediction map, y integer class labels.
    # 2*48*96 = 9216 elems -> 72 full lanes-rows: one 64-row block through the
    # kernel + 8-row (+0 lane) pure-JAX tail.
    B, H, W = 2, 48, 96
    x = jax.random.normal(k1, (B, H, W), dtype=jnp.float32)
    y = jax.random.randint(k2, (B, H, W), 0, C, dtype=jnp.int32)

    out_w = weighted_categorical_mse(x, y, weights)
    out_u = weighted_categorical_mse(x, y, None)
    jax.block_until_ready((out_w, out_u))

    yfl = y.astype(jnp.float32)
    ref_w = jnp.mean(weights[y] * (x - yfl) ** 2)
    ref_u = jnp.mean((x - yfl) ** 2)
    assert jnp.allclose(out_w, ref_w, rtol=1e-5, atol=1e-5), (out_w, ref_w)
    assert jnp.allclose(out_u, ref_u, rtol=1e-5, atol=1e-5), (out_u, ref_u)

    # Case 2: small block_rows to exercise the 2-way "parallel" split plus
    # multi-step accumulation, with narrow int8 labels (sub-32-bit streaming).
    B2, H2, W2 = 2, 64, 128     # 16384 elems -> 128 rows; br=32 -> 4 steps, 2 splits
    x2 = jax.random.normal(k3, (B2, H2, W2), dtype=jnp.float32)
    y2 = jax.random.randint(k4, (B2, H2, W2), 0, C, dtype=jnp.int32).astype(jnp.int8)
    out_w2 = weighted_categorical_mse(x2, y2, weights, block_rows=32)
    out_u2 = weighted_categorical_mse(x2, y2, None, block_rows=32)
    jax.block_until_ready((out_w2, out_u2))
    y2f = y2.astype(jnp.float32)
    ref_w2 = jnp.mean(weights[y2.astype(jnp.int32)] * (x2 - y2f) ** 2)
    ref_u2 = jnp.mean((x2 - y2f) ** 2)
    assert jnp.allclose(out_w2, ref_w2, rtol=1e-5, atol=1e-5), (out_w2, ref_w2)
    assert jnp.allclose(out_u2, ref_u2, rtol=1e-5, atol=1e-5), (out_u2, ref_u2)

    # Case 3: ragged size too small for a full block -> pure-JAX fallback path.
    x3 = jax.random.normal(k1, (1, 11, 121), dtype=jnp.float32)
    y3 = jax.random.randint(k2, (1, 11, 121), 0, C, dtype=jnp.int32)
    out_w3 = weighted_categorical_mse(x3, y3, weights)
    out_u3 = weighted_categorical_mse(x3, y3, None)
    jax.block_until_ready((out_w3, out_u3))
    y3f = y3.astype(jnp.float32)
    ref_w3 = jnp.mean(weights[y3] * (x3 - y3f) ** 2)
    ref_u3 = jnp.mean((x3 - y3f) ** 2)
    assert jnp.allclose(out_w3, ref_w3, rtol=1e-5, atol=1e-5), (out_w3, ref_w3)
    assert jnp.allclose(out_u3, ref_u3, rtol=1e-5, atol=1e-5), (out_u3, ref_u3)

    print("KERNEL_OK")
</pallas_src>

<mosaic_0001>
module attributes {stable_mosaic.version = 11 : i64} {
  func.func @kernel(%arg0: i32, %arg1: i32, %arg2: memref<8xf32, #tpu.memory_space<smem>>, %arg3: memref<64x128xf32, #tpu.memory_space<vmem>>, %arg4: memref<64x128xi32, #tpu.memory_space<vmem>>, %arg5: memref<32x128xf32, #tpu.memory_space<vmem>>) attributes {dimension_semantics = [#tpu.dimension_semantics<parallel>, #tpu.dimension_semantics<arbitrary>], iteration_bounds = array<i64: 1, 1>, scalar_prefetch = 0 : i64, scratch_operands = 0 : i64, tpu.core_type = #tpu.core_type<tc>, window_params = [{transform_indices = @transform_0, window_bounds = array<i64: 8>}, {transform_indices = @transform_1, window_bounds = array<i64: 64, 128>}, {transform_indices = @transform_2, window_bounds = array<i64: 64, 128>}, {transform_indices = @transform_3, window_bounds = array<i64: 32, 128>}]} {
    %c0_i32 = arith.constant 0 : i32
    %0 = arith.cmpi eq, %arg1, %c0_i32 : i32
    %1 = arith.extui %0 : i1 to i32
    %c0_i32_0 = arith.constant 0 : i32
    %2 = arith.cmpi ne, %1, %c0_i32_0 : i32
    scf.if %2 {
      %cst_9 = arith.constant 0.000000e+00 : f32
      %51 = vector.broadcast %cst_9 : f32 to vector<32x128xf32>
      %c0_10 = arith.constant 0 : index
      %c0_11 = arith.constant 0 : index
      %52 = vector.load %arg5[%c0_10, %c0_11] : memref<32x128xf32, #tpu.memory_space<vmem>>, vector<32x128xf32>
      tpu.vector_store %arg5[%c0_10, %c0_11], %51 {strides = array<i32>} : memref<32x128xf32, #tpu.memory_space<vmem>>, vector<32x128xf32>,
    } else {
    }
    %c0 = arith.constant 0 : index
    %c0_1 = arith.constant 0 : index
    %3 = vector.load %arg3[%c0, %c0_1] : memref<64x128xf32, #tpu.memory_space<vmem>>, vector<64x128xf32>
    %c0_2 = arith.constant 0 : index
    %c0_3 = arith.constant 0 : index
    %4 = vector.load %arg4[%c0_2, %c0_3] : memref<64x128xi32, #tpu.memory_space<vmem>>, vector<64x128xi32>
    %5 = arith.sitofp %4 : vector<64x128xi32> to vector<64x128xf32>
    %6 = arith.subf %3, %5 : vector<64x128xf32>
    %c0_4 = arith.constant 0 : index
    %7 = memref.load %arg2[%c0_4] : memref<8xf32, #tpu.memory_space<smem>>
    %8 = vector.broadcast %7 : f32 to vector<64x128xf32>
    %c1_i32 = arith.constant 1 : i32
    %9 = vector.broadcast %c1_i32 : i32 to vector<64x128xi32>
    %10 = arith.cmpi eq, %4, %9 : vector<64x128xi32>
    %c1 = arith.constant 1 : index
    %11 = memref.load %arg2[%c1] : memref<8xf32, #tpu.memory_space<smem>>
    %12 = vector.broadcast %11 : f32 to vector<64x128xf32>
    %13 = arith.select %10, %12, %8 : vector<64x128xi1>, vector<64x128xf32>
    %c2_i32 = arith.constant 2 : i32
    %14 = vector.broadcast %c2_i32 : i32 to vector<64x128xi32>
    %15 = arith.cmpi eq, %4, %14 : vector<64x128xi32>
    %c2 = arith.constant 2 : index
    %16 = memref.load %arg2[%c2] : memref<8xf32, #tpu.memory_space<smem>>
    %17 = vector.broadcast %16 : f32 to vector<64x128xf32>
    %18 = arith.select %15, %17, %13 : vector<64x128xi1>, vector<64x128xf32>
    %c3_i32 = arith.constant 3 : i32
    %19 = vector.broadcast %c3_i32 : i32 to vector<64x128xi32>
    %20 = arith.cmpi eq, %4, %19 : vector<64x128xi32>
    %c3 = arith.constant 3 : index
    %21 = memref.load %arg2[%c3] : memref<8xf32, #tpu.memory_space<smem>>
    %22 = vector.broadcast %21 : f32 to vector<64x128xf32>
    %23 = arith.select %20, %22, %18 : vector<64x128xi1>, vector<64x128xf32>
    %c4_i32 = arith.constant 4 : i32
    %24 = vector.broadcast %c4_i32 : i32 to vector<64x128xi32>
    %25 = arith.cmpi eq, %4, %24 : vector<64x128xi32>
    %c4 = arith.constant 4 : index
    %26 = memref.load %arg2[%c4] : memref<8xf32, #tpu.memory_space<smem>>
    %27 = vector.broadcast %26 : f32 to vector<64x128xf32>
    %28 = arith.select %25, %27, %23 : vector<64x128xi1>, vector<64x128xf32>
    %c5_i32 = arith.constant 5 : i32
    %29 = vector.broadcast %c5_i32 : i32 to vector<64x128xi32>
    %30 = arith.cmpi eq, %4, %29 : vector<64x128xi32>
    %c5 = arith.constant 5 : index
    %31 = memref.load %arg2[%c5] : memref<8xf32, #tpu.memory_space<smem>>
    %32 = vector.broadcast %31 : f32 to vector<64x128xf32>
    %33 = arith.select %30, %32, %28 : vector<64x128xi1>, vector<64x128xf32>
    %c6_i32 = arith.constant 6 : i32
    %34 = vector.broadcast %c6_i32 : i32 to vector<64x128xi32>
    %35 = arith.cmpi eq, %4, %34 : vector<64x128xi32>
    %c6 = arith.constant 6 : index
    %36 = memref.load %arg2[%c6] : memref<8xf32, #tpu.memory_space<smem>>
    %37 = vector.broadcast %36 : f32 to vector<64x128xf32>
    %38 = arith.select %35, %37, %33 : vector<64x128xi1>, vector<64x128xf32>
    %c7_i32 = arith.constant 7 : i32
    %39 = vector.broadcast %c7_i32 : i32 to vector<64x128xi32>
    %40 = arith.cmpi eq, %4, %39 : vector<64x128xi32>
    %c7 = arith.constant 7 : index
    %41 = memref.load %arg2[%c7] : memref<8xf32, #tpu.memory_space<smem>>
    %42 = vector.broadcast %41 : f32 to vector<64x128xf32>
    %43 = arith.select %40, %42, %38 : vector<64x128xi1>, vector<64x128xf32>
    %44 = arith.mulf %43, %6 : vector<64x128xf32>
    %45 = arith.mulf %44, %6 : vector<64x128xf32>
    %c0_5 = arith.constant 0 : index
    %c0_6 = arith.constant 0 : index
    %46 = vector.load %arg5[%c0_5, %c0_6] : memref<32x128xf32, #tpu.memory_space<vmem>>, vector<32x128xf32>
    %47 = vector.shape_cast %45 : vector<64x128xf32> to vector<2x32x128xf32>
    %cst = arith.constant dense<0.000000e+00> : vector<32x128xf32>
    %48 = vector.multi_reduction <add>, %47, %cst [0] : vector<2x32x128xf32> to vector<32x128xf32>
    %49 = arith.addf %46, %48 : vector<32x128xf32>
    %c0_7 = arith.constant 0 : index
    %c0_8 = arith.constant 0 : index
    %50 = vector.load %arg5[%c0_7, %c0_8] : memref<32x128xf32, #tpu.memory_space<vmem>>, vector<32x128xf32>
    tpu.vector_store %arg5[%c0_7, %c0_8], %49 {strides = array<i32>} : memref<32x128xf32, #tpu.memory_space<vmem>>, vector<32x128xf32>,
    return
  }
  func.func @transform_0(%arg0: i32, %arg1: i32) -> i32 {
    %c0_i32 = arith.constant 0 : i32
    %c0_i32_0 = arith.constant 0 : i32
    return %c0_i32 : i32
  }
  func.func @transform_1(%arg0: i32, %arg1: i32) -> (i32, i32) {
    %c1_i32 = arith.constant 1 : i32
    %0 = arith.muli %arg0, %c1_i32 : i32
    %1 = arith.addi %0, %arg1 : i32
    %c0_i32 = arith.constant 0 : i32
    %c0_i32_0 = arith.constant 0 : i32
    return %1, %c0_i32 : i32, i32
  }
  func.func @transform_2(%arg0: i32, %arg1: i32) -> (i32, i32) {
    %c1_i32 = arith.constant 1 : i32
    %0 = arith.muli %arg0, %c1_i32 : i32
    %1 = arith.addi %0, %arg1 : i32
    %c0_i32 = arith.constant 0 : i32
    %c0_i32_0 = arith.constant 0 : i32
    return %1, %c0_i32 : i32, i32
  }
  func.func @transform_3(%arg0: i32, %arg1: i32) -> (i32, i32) {
    %c0_i32 = arith.constant 0 : i32
    %c0_i32_0 = arith.constant 0 : i32
    return %arg0, %c0_i32 : i32, i32
  }
}

</mosaic_0001>

<llo_original>
// kernel: tpu_custom_call.1
$region0: #{tpu_custom_call.1}
  #allocation0 [shape = 'u32[]', space=smem, size = 0x4, offset = 0x4, fixed_abs, tag = 'smem constant byte address 0x4 - core index']
  #allocation1 [shape = 'u32[144,128]{1,0:T(1,128)}', space=vmem, size = 0x12000, scoped, tag = 'internal scratch']
  %s0 = inlined_call_operand.hbm [shape: f32[8], index: 0, kind: input, shape index: {}]
  %s1 = inlined_call_operand.hbm [shape: f32[64,128], index: 1, kind: input, shape index: {}]
  %s2 = inlined_call_operand.hbm [shape: s32[64,128], index: 2, kind: input, shape index: {}]
  %s3 = inlined_call_operand.hbm [shape: f32[32,128], index: 3, kind: output, shape index: {}]
  %s4 = sld [smem:[#allocation0]]
  $region38: #{tpu_custom_call.1} parent=0
    _
  %s6 = ssub.s32 1, %s4
  %s7 = scalar_select 0, %s6, %s4
  $region1: #{tpu_custom_call.1} parent=0
    #allocation2 [shape = 'u8[512]{0}', space=smem, size = 0x200, scoped, tag = 'input window, operand 0, single buffered']
    #allocation3 [shape = 's32[1]{0}', space=sflag, size = 0x4, scoped, tag = 'scoped memory for tpu_custom_call.1']
    #allocation4 [shape = 's32[1]{0}', space=sflag, size = 0x4, scoped, tag = 'scoped memory for tpu_custom_call.1']
    #allocation5 [shape = 's32[1]{0}', space=sflag, size = 0x4, scoped, tag = 'scoped memory for tpu_custom_call.1']
    #allocation6 [shape = 'u8[32768]{0}', space=vmem, size = 0x8000, scoped, tag = 'input window, operand 1, single buffered']
    #allocation7 [shape = 'u8[32768]{0}', space=vmem, size = 0x8000, scoped, tag = 'input window, operand 2, single buffered']
    #allocation8 [shape = 's32[1]{0}', space=sflag, size = 0x4, scoped, tag = 'scoped memory for tpu_custom_call.1']
    #allocation9 [shape = 'u8[16384]{0}', space=vmem, size = 0x4000, scoped, tag = 'output window, operand 0, single buffered']
    %8 = vsyncpa [#allocation5], 0
    %9 = vsyncpa [#allocation3], 0
    %10 = vsyncpa [#allocation8], 0
    %11 = vsyncpa [#allocation4], 0
    // Predicated region
    $region2: #{tpu_custom_call.1} parent=1 // pred_check
      _
    $region3: #{tpu_custom_call.1} parent=1 // pred_check_branch
      %13 = sbr.rel (0) target = $region5
    $region4: #{tpu_custom_call.1} parent=1 // pred_region
      %s15 = ssub.s32 16, 16
      %16 = vsyncadd [#allocation5], %s15
      %19 = dma.hbm_to_smem %s0, 16, [#allocation2], [#allocation5]
    $region5: #{tpu_custom_call.1} parent=1 // pred_fallthru
      _
    // Predicated region
    $region6: #{tpu_custom_call.1} parent=1 // pred_check
      _
    $region7: #{tpu_custom_call.1} parent=1 // pred_check_branch
      %21 = sbr.rel (0) target = $region9
    $region8: #{tpu_custom_call.1} parent=1 // pred_region
      %s22 = sadd.s32 0, 0
      %s23 = smul.u32 8, %s22
      %s25 = ssub.s32 1024, 1024
      %26 = vsyncadd [#allocation3], %s25
      %s27 = smul.addr %s23, 128
      %s28 = scalar_lea.hbm %s1, %s27
      %s29 = sshll.u32 [#allocation6], 4
      %s30 = int_to_ptr.vmem [resolvable:$true] %s29
      %35 = dma.hbm_to_vmem [thread:$0]  %s28, 1024, %s30, [#allocation3], 128, 128, 8
    $region9: #{tpu_custom_call.1} parent=1 // pred_fallthru
      _
    // Predicated region
    $region10: #{tpu_custom_call.1} parent=1 // pred_check
      _
    $region11: #{tpu_custom_call.1} parent=1 // pred_check_branch
      %37 = sbr.rel (0) target = $region13
    $region12: #{tpu_custom_call.1} parent=1 // pred_region
      %s38 = sadd.s32 0, 0
      %s39 = smul.u32 8, %s38
      %s41 = ssub.s32 1024, 1024
      %42 = vsyncadd [#allocation8], %s41
      %s43 = smul.addr %s39, 128
      %s44 = scalar_lea.hbm %s2, %s43
      %s45 = sshll.u32 [#allocation7], 4
      %s46 = int_to_ptr.vmem [resolvable:$true] %s45
      %51 = dma.hbm_to_vmem [thread:$0]  %s44, 1024, %s46, [#allocation8], 128, 128, 8
    $region13: #{tpu_custom_call.1} parent=1 // pred_fallthru
      _
    // Predicated region
    $region14: #{tpu_custom_call.1} parent=1 // pred_check
      _
    $region15: #{tpu_custom_call.1} parent=1 // pred_check_branch
      %53 = sbr.rel (0) target = $region17
    $region16: #{tpu_custom_call.1} parent=1 // pred_region
      %54 = dma.done [#allocation5], 16
    $region17: #{tpu_custom_call.1} parent=1 // pred_fallthru
      _
    // Predicated region
    $region18: #{tpu_custom_call.1} parent=1 // pred_check
      _
    $region19: #{tpu_custom_call.1} parent=1 // pred_check_branch
      %56 = sbr.rel (0) target = $region21
    $region20: #{tpu_custom_call.1} parent=1 // pred_region
      %57 = dma.done [#allocation3], 1024
    $region21: #{tpu_custom_call.1} parent=1 // pred_fallthru
      _
    // Predicated region
    $region22: #{tpu_custom_call.1} parent=1 // pred_check
      _
    $region23: #{tpu_custom_call.1} parent=1 // pred_check_branch
      %59 = sbr.rel (0) target = $region25
    $region24: #{tpu_custom_call.1} parent=1 // pred_region
      %60 = dma.done [#allocation8], 1024
    $region25: #{tpu_custom_call.1} parent=1 // pred_fallthru
      _
    %61 = sfence
    %s62 = sadd.s32 0, 0
    %s63 = smul.u32 8, %s62
    %s64 = sadd.s32 0, 0
    %s65 = smul.u32 8, %s64
    %p66 = scmp.eq.s32.totalorder 0, 0
    // Predicated region
    $region26: #{tpu_custom_call.1} parent=1 // pred_check
      %p67 = pneg %p66
    $region27: #{tpu_custom_call.1} parent=1 // pred_check_branch
      %69 = sbr.rel (%p67) target = $region29
    $region28: #{tpu_custom_call.1} parent=1 // pred_region
      %70 = vst [vmem:[#allocation9] sm:$0xff] 0.0
      %71 = vst [vmem:[#allocation9 + $0x8] sm:$0xff] 0.0
      %72 = vst [vmem:[#allocation9 + $0x10] sm:$0xff] 0.0
      %73 = vst [vmem:[#allocation9 + $0x18] sm:$0xff] 0.0
    $region29: #{tpu_custom_call.1} parent=1 // pred_fallthru
      _
    %v74 = vld [vmem:[#allocation6] sm:$0xff]
    %v75 = vld [vmem:[#allocation6 + $0x8] sm:$0xff]
    %v76 = vld [vmem:[#allocation6 + $0x10] sm:$0xff]
    %v77 = vld [vmem:[#allocation6 + $0x18] sm:$0xff]
    %v78 = vld [vmem:[#allocation6 + $0x20] sm:$0xff]
    %v79 = vld [vmem:[#allocation6 + $0x28] sm:$0xff]
    %v80 = vld [vmem:[#allocation6 + $0x30] sm:$0xff]
    %v81 = vld [vmem:[#allocation6 + $0x38] sm:$0xff]
    %v82 = vld [vmem:[#allocation7] sm:$0xff]
    %v83 = vld [vmem:[#allocation7 + $0x8] sm:$0xff]
    %v84 = vld [vmem:[#allocation7 + $0x10] sm:$0xff]
    %v85 = vld [vmem:[#allocation7 + $0x18] sm:$0xff]
    %v86 = vld [vmem:[#allocation7 + $0x20] sm:$0xff]
    %v87 = vld [vmem:[#allocation7 + $0x28] sm:$0xff]
    %v88 = vld [vmem:[#allocation7 + $0x30] sm:$0xff]
    %v89 = vld [vmem:[#allocation7 + $0x38] sm:$0xff]
    %v90 = vcvt.s32.f32 %v82
    %v91 = vcvt.s32.f32 %v83
    %v92 = vcvt.s32.f32 %v84
    %v93 = vcvt.s32.f32 %v85
    %v94 = vcvt.s32.f32 %v86
    %v95 = vcvt.s32.f32 %v87
    %v96 = vcvt.s32.f32 %v88
    %v97 = vcvt.s32.f32 %v89
    %v98 = vsub.f32 %v74, %v90
    %v99 = vsub.f32 %v75, %v91
    %v100 = vsub.f32 %v76, %v92
    %v101 = vsub.f32 %v77, %v93
    %v102 = vsub.f32 %v78, %v94
    %v103 = vsub.f32 %v79, %v95
    %v104 = vsub.f32 %v80, %v96
    %v105 = vsub.f32 %v81, %v97
    %s106 = sld [smem:[#allocation2]]
    %v107 = vstv %s106
    %vm108 = vcmp.eq.s32.totalorder %v82, 1
    %vm109 = vcmp.eq.s32.totalorder %v83, 1
    %vm110 = vcmp.eq.s32.totalorder %v84, 1
    %vm111 = vcmp.eq.s32.totalorder %v85, 1
    %vm112 = vcmp.eq.s32.totalorder %v86, 1
    %vm113 = vcmp.eq.s32.totalorder %v87, 1
    %vm114 = vcmp.eq.s32.totalorder %v88, 1
    %vm115 = vcmp.eq.s32.totalorder %v89, 1
    %s116 = sld [smem:[#allocation2 + $0x1]]
    %v117 = vstv %s116
    %v118 = vsel %vm108, %v117, %v107
    %v119 = vsel %vm109, %v117, %v107
    %v120 = vsel %vm110, %v117, %v107
    %v121 = vsel %vm111, %v117, %v107
    %v122 = vsel %vm112, %v117, %v107
    %v123 = vsel %vm113, %v117, %v107
    %v124 = vsel %vm114, %v117, %v107
    %v125 = vsel %vm115, %v117, %v107
    %vm126 = vcmp.eq.s32.totalorder %v82, 2
    %vm127 = vcmp.eq.s32.totalorder %v83, 2
    %vm128 = vcmp.eq.s32.totalorder %v84, 2
    %vm129 = vcmp.eq.s32.totalorder %v85, 2
    %vm130 = vcmp.eq.s32.totalorder %v86, 2
    %vm131 = vcmp.eq.s32.totalorder %v87, 2
    %vm132 = vcmp.eq.s32.totalorder %v88, 2
    %vm133 = vcmp.eq.s32.totalorder %v89, 2
    %s134 = sld [smem:[#allocation2 + $0x2]]
    %v135 = vstv %s134
    %v136 = vsel %vm126, %v135, %v118
    %v137 = vsel %vm127, %v135, %v119
    %v138 = vsel %vm128, %v135, %v120
    %v139 = vsel %vm129, %v135, %v121
    %v140 = vsel %vm130, %v135, %v122
    %v141 = vsel %vm131, %v135, %v123
    %v142 = vsel %vm132, %v135, %v124
    %v143 = vsel %vm133, %v135, %v125
    %vm144 = vcmp.eq.s32.totalorder %v82, 3
    %vm145 = vcmp.eq.s32.totalorder %v83, 3
    %vm146 = vcmp.eq.s32.totalorder %v84, 3
    %vm147 = vcmp.eq.s32.totalorder %v85, 3
    %vm148 = vcmp.eq.s32.totalorder %v86, 3
    %vm149 = vcmp.eq.s32.totalorder %v87, 3
    %vm150 = vcmp.eq.s32.totalorder %v88, 3
    %vm151 = vcmp.eq.s32.totalorder %v89, 3
    %s152 = sld [smem:[#allocation2 + $0x3]]
    %v153 = vstv %s152
    %v154 = vsel %vm144, %v153, %v136
    %v155 = vsel %vm145, %v153, %v137
    %v156 = vsel %vm146, %v153, %v138
    %v157 = vsel %vm147, %v153, %v139
    %v158 = vsel %vm148, %v153, %v140
    %v159 = vsel %vm149, %v153, %v141
    %v160 = vsel %vm150, %v153, %v142
    %v161 = vsel %vm151, %v153, %v143
    %vm162 = vcmp.eq.s32.totalorder %v82, 4
    %vm163 = vcmp.eq.s32.totalorder %v83, 4
    %vm164 = vcmp.eq.s32.totalorder %v84, 4
    %vm165 = vcmp.eq.s32.totalorder %v85, 4
    %vm166 = vcmp.eq.s32.totalorder %v86, 4
    %vm167 = vcmp.eq.s32.totalorder %v87, 4
    %vm168 = vcmp.eq.s32.totalorder %v88, 4
    %vm169 = vcmp.eq.s32.totalorder %v89, 4
    %s170 = sld [smem:[#allocation2 + $0x4]]
    %v171 = vstv %s170
    %v172 = vsel %vm162, %v171, %v154
    %v173 = vsel %vm163, %v171, %v155
    %v174 = vsel %vm164, %v171, %v156
    %v175 = vsel %vm165, %v171, %v157
    %v176 = vsel %vm166, %v171, %v158
    %v177 = vsel %vm167, %v171, %v159
    %v178 = vsel %vm168, %v171, %v160
    %v179 = vsel %vm169, %v171, %v161
    %vm180 = vcmp.eq.s32.totalorder %v82, 5
    %vm181 = vcmp.eq.s32.totalorder %v83, 5
    %vm182 = vcmp.eq.s32.totalorder %v84, 5
    %vm183 = vcmp.eq.s32.totalorder %v85, 5
    %vm184 = vcmp.eq.s32.totalorder %v86, 5
    %vm185 = vcmp.eq.s32.totalorder %v87, 5
    %vm186 = vcmp.eq.s32.totalorder %v88, 5
    %vm187 = vcmp.eq.s32.totalorder %v89, 5
    %s188 = sld [smem:[#allocation2 + $0x5]]
    %v189 = vstv %s188
    %v190 = vsel %vm180, %v189, %v172
    %v191 = vsel %vm181, %v189, %v173
    %v192 = vsel %vm182, %v189, %v174
    %v193 = vsel %vm183, %v189, %v175
    %v194 = vsel %vm184, %v189, %v176
    %v195 = vsel %vm185, %v189, %v177
    %v196 = vsel %vm186, %v189, %v178
    %v197 = vsel %vm187, %v189, %v179
    %vm198 = vcmp.eq.s32.totalorder %v82, 6
    %vm199 = vcmp.eq.s32.totalorder %v83, 6
    %vm200 = vcmp.eq.s32.totalorder %v84, 6
    %vm201 = vcmp.eq.s32.totalorder %v85, 6
    %vm202 = vcmp.eq.s32.totalorder %v86, 6
    %vm203 = vcmp.eq.s32.totalorder %v87, 6
    %vm204 = vcmp.eq.s32.totalorder %v88, 6
    %vm205 = vcmp.eq.s32.totalorder %v89, 6
    %s206 = sld [smem:[#allocation2 + $0x6]]
    %v207 = vstv %s206
    %v208 = vsel %vm198, %v207, %v190
    %v209 = vsel %vm199, %v207, %v191
    %v210 = vsel %vm200, %v207, %v192
    %v211 = vsel %vm201, %v207, %v193
    %v212 = vsel %vm202, %v207, %v194
    %v213 = vsel %vm203, %v207, %v195
    %v214 = vsel %vm204, %v207, %v196
    %v215 = vsel %vm205, %v207, %v197
    %vm216 = vcmp.eq.s32.totalorder %v82, 7
    %vm217 = vcmp.eq.s32.totalorder %v83, 7
    %vm218 = vcmp.eq.s32.totalorder %v84, 7
    %vm219 = vcmp.eq.s32.totalorder %v85, 7
    %vm220 = vcmp.eq.s32.totalorder %v86, 7
    %vm221 = vcmp.eq.s32.totalorder %v87, 7
    %vm222 = vcmp.eq.s32.totalorder %v88, 7
    %vm223 = vcmp.eq.s32.totalorder %v89, 7
    %s224 = sld [smem:[#allocation2 + $0x7]]
    %v225 = vstv %s224
    %v226 = vsel %vm216, %v225, %v208
    %v227 = vsel %vm217, %v225, %v209
    %v228 = vsel %vm218, %v225, %v210
    %v229 = vsel %vm219, %v225, %v211
    %v230 = vsel %vm220, %v225, %v212
    %v231 = vsel %vm221, %v225, %v213
    %v232 = vsel %vm222, %v225, %v214
    %v233 = vsel %vm223, %v225, %v215
    %v234 = vmul.f32 %v226, %v98
    %v235 = vmul.f32 %v227, %v99
    %v236 = vmul.f32 %v228, %v100
    %v237 = vmul.f32 %v229, %v101
    %v238 = vmul.f32 %v230, %v102
    %v239 = vmul.f32 %v231, %v103
    %v240 = vmul.f32 %v232, %v104
    %v241 = vmul.f32 %v233, %v105
    %v242 = vmul.f32 %v234, %v98
    %v243 = vmul.f32 %v235, %v99
    %v244 = vmul.f32 %v236, %v100
    %v245 = vmul.f32 %v237, %v101
    %v246 = vmul.f32 %v238, %v102
    %v247 = vmul.f32 %v239, %v103
    %v248 = vmul.f32 %v240, %v104
    %v249 = vmul.f32 %v241, %v105
    %v250 = vld [vmem:[#allocation9] sm:$0xff]
    %v251 = vld [vmem:[#allocation9 + $0x8] sm:$0xff]
    %v252 = vld [vmem:[#allocation9 + $0x10] sm:$0xff]
    %v253 = vld [vmem:[#allocation9 + $0x18] sm:$0xff]
    %v254 = vadd.f32 %v242, %v246
    %v255 = vadd.f32 %v243, %v247
    %v256 = vadd.f32 %v244, %v248
    %v257 = vadd.f32 %v245, %v249
    %v258 = vadd.f32 %v250, %v254
    %v259 = vadd.f32 %v251, %v255
    %v260 = vadd.f32 %v252, %v256
    %v261 = vadd.f32 %v253, %v257
    %262 = vst [vmem:[#allocation9] sm:$0xff] %v258
    %263 = vst [vmem:[#allocation9 + $0x8] sm:$0xff] %v259
    %264 = vst [vmem:[#allocation9 + $0x10] sm:$0xff] %v260
    %265 = vst [vmem:[#allocation9 + $0x18] sm:$0xff] %v261
    // Predicated region
    $region30: #{tpu_custom_call.1} parent=1 // pred_check
      _
    $region31: #{tpu_custom_call.1} parent=1 // pred_check_branch
      %267 = sbr.rel (0) target = $region33
    $region32: #{tpu_custom_call.1} parent=1 // pred_region
      %s269 = ssub.s32 512, 512
      %270 = vsyncadd [#allocation4], %s269
      %s271 = sshll.u32 [#allocation9], 4
      %s272 = int_to_ptr.vmem [resolvable:$true] %s271
      %277 = dma.vmem_to_hbm [thread:$0]  %s272, 512, %s3, [#allocation4], 128, 128, 8
    $region33: #{tpu_custom_call.1} parent=1 // pred_fallthru
      _
    // Predicated region
    $region34: #{tpu_custom_call.1} parent=1 // pred_check
      _
    $region35: #{tpu_custom_call.1} parent=1 // pred_check_branch
      %279 = sbr.rel (0) target = $region37
    $region36: #{tpu_custom_call.1} parent=1 // pred_region
      %280 = dma.done [#allocation4], 512
    $region37: #{tpu_custom_call.1} parent=1 // pred_fallthru
      _
    %281 = vsyncpa [#allocation3], 1
    %282 = vsyncpa [#allocation8], 1
    %283 = vsyncpa [#allocation4], 1
    %284 = vsyncpa [#allocation5], 1

</llo_original>
